<compile_context>
chip_gen: v7x
topology: tpu7x:2x2x1
jax: 0.10.0
libtpu: 0.0.40
codegen_flags: <defaults>
</compile_context>

<pallas_src>
import functools

import jax
import jax.numpy as jnp
import numpy as np
from jax.experimental import pallas as pl
from jax.experimental.pallas import tpu as pltpu


# ---------------------------------------------------------------------------
# Pallas kernel: attention + LSTM cell + fc_out, one decode step.
# ---------------------------------------------------------------------------
def _decoder_step_kernel(
    emb_ref,     # (B, E)        embedded input token
    h_ref,       # (B, H)        previous hidden state
    c_ref,       # (B, H)        previous cell state
    enc_ref,     # (B, S, H)     encoder outputs
    w1t_ref,     # (H, H)        attention W1 (pre-transposed)
    w2t_ref,     # (H, H)        attention W2 (pre-transposed)
    v_ref,       # (1, H)        attention v
    wxt_ref,     # (E+2H, 4H)    fused LSTM weight for [emb, ctx, h] (pre-transposed)
    bias_ref,    # (1, 4H)       b_ih + b_hh
    fcwt_ref,    # (H, Vpad)     fc_out weight (pre-transposed, lane-padded)
    fcb_ref,     # (1, Vpad)     fc_out bias (lane-padded)
    logits_ref,  # (B, Vpad) out
    hnew_ref,    # (B, H)    out
    cnew_ref,    # (B, H)    out
    attn_ref,    # (B, 1, S) out (lane-dense over S)
    *, B, S, H,
):
    h = h_ref[...]                                        # (B, H)
    c = c_ref[...]                                        # (B, H)
    enc3 = enc_ref[...]                                   # (B, S, H)
    enc2 = enc3.reshape(B * S, H)                         # leading-dim merge (layout-free)

    # ---------------- additive attention, fully batched ----------------
    w1h = jnp.dot(h, w1t_ref[...], preferred_element_type=jnp.float32)      # (B, H)
    w2e = jnp.dot(enc2, w2t_ref[...], preferred_element_type=jnp.float32)   # (B*S, H)

    # Repeat each batch row of w1h S times along sublanes with a one-hot matmul
    # (keeps the per-batch broadcast on the otherwise-idle MXU, no per-b slices).
    i_idx = jax.lax.broadcasted_iota(jnp.int32, (B * S, B), 0)
    j_idx = jax.lax.broadcasted_iota(jnp.int32, (B * S, B), 1)
    rep = ((i_idx >= j_idx * S) & (i_idx < (j_idx + 1) * S)).astype(jnp.float32)
    w1h_rep = jnp.dot(rep, w1h, preferred_element_type=jnp.float32)         # (B*S, H)

    t3 = jnp.tanh(w2e + w1h_rep).reshape(B, S, H)                           # (B, S, H)

    # Energy on the MXU, lane-dense over S (flash-attention style batched dot).
    v3 = jnp.broadcast_to(v_ref[...].reshape(1, 1, H), (B, 1, H))
    energy = jnp.einsum("bqh,bsh->bqs", v3, t3,
                        preferred_element_type=jnp.float32)                 # (B, 1, S)

    # Softmax over the sequence (last / lane axis), max-stabilized.
    m = jnp.max(energy, axis=-1, keepdims=True)
    p = jnp.exp(energy - m)
    attn = p / jnp.sum(p, axis=-1, keepdims=True)                           # (B, 1, S)
    attn_ref[...] = attn                                                    # single store

    # Context as one batched MXU contraction.
    ctx3 = jnp.einsum("bqs,bsh->bqh", attn, enc3,
                      preferred_element_type=jnp.float32)                   # (B, 1, H)
    # (B,1,H) -> (B,H): concat of static row slices (cheap relayout; avoids a
    # cross-tile squeeze-reshape).
    ctx = jnp.concatenate([ctx3[b] for b in range(B)], axis=0)              # (B, H)

    # ---------------- single-step LSTM: one fused gate matmul ----------------
    x = jnp.concatenate([emb_ref[...], ctx, h], axis=1)                     # (B, E+2H)
    gates = (jnp.dot(x, wxt_ref[...], preferred_element_type=jnp.float32)
             + bias_ref[...])                                               # (B, 4H)
    i_g = jax.nn.sigmoid(gates[:, 0:H])
    f_g = jax.nn.sigmoid(gates[:, H:2 * H])
    g_g = jnp.tanh(gates[:, 2 * H:3 * H])
    o_g = jax.nn.sigmoid(gates[:, 3 * H:4 * H])
    c_new = f_g * c + i_g * g_g
    h_new = o_g * jnp.tanh(c_new)
    cnew_ref[...] = c_new
    hnew_ref[...] = h_new

    # ---------------- fc_out (vocab padded to a lane multiple) ----------------
    logits_ref[...] = (jnp.dot(h_new, fcwt_ref[...],
                               preferred_element_type=jnp.float32)
                       + fcb_ref[...])                                      # (B, Vpad)


# ---------------------------------------------------------------------------
# One-time parameter preparation (hoisted out of the per-step path).
# ---------------------------------------------------------------------------
def prepare_decoder_params(params, *, lane=128):
    V, _E = params["embedding"].shape
    H = params["W1"].shape[0]
    v_pad = ((V + lane - 1) // lane) * lane
    return {
        "embedding": params["embedding"],                                      # (V, E)
        "w1_t": params["W1"].T,                                                # (H, H)
        "w2_t": params["W2"].T,                                                # (H, H)
        "v": params["v"],                                                      # (1, H)
        # fused gate weight for x = [emb, ctx, h]:
        "w_x_t": jnp.concatenate([params["w_ih"], params["w_hh"]], axis=1).T,  # (E+2H, 4H)
        "bias": (params["b_ih"] + params["b_hh"]).reshape(1, 4 * H),           # (1, 4H)
        "fc_w_t": jnp.pad(params["fc_w"].T, ((0, 0), (0, v_pad - V))),         # (H, Vpad)
        "fc_b": jnp.pad(params["fc_b"], (0, v_pad - V)).reshape(1, v_pad),     # (1, Vpad)
    }


# ---------------------------------------------------------------------------
# Per-step wrapper (glue: embedding gather, pallas_call, padding slice).
# ---------------------------------------------------------------------------
def decoder_rnn_forward(input_token, hidden, cell, encoder_outputs, prepped):
    B, S, H = encoder_outputs.shape
    V, _E = prepped["embedding"].shape
    v_pad = prepped["fc_w_t"].shape[1]

    # Embedding gather stays in the wrapper (tiny at this vocab size).
    # TODO(synk): at realistic vocab sizes, move the gather in-kernel via
    # scalar-prefetched token ids + per-row DMA from the table.
    emb = prepped["embedding"][input_token]                 # (B, E)

    kernel = functools.partial(_decoder_step_kernel, B=B, S=S, H=H)
    vmem = pl.BlockSpec(memory_space=pltpu.MemorySpace.VMEM)

    out_shape = (
        jax.ShapeDtypeStruct((B, v_pad), jnp.float32),      # logits (lane-padded)
        jax.ShapeDtypeStruct((B, H), jnp.float32),          # h_new
        jax.ShapeDtypeStruct((B, H), jnp.float32),          # c_new
        jax.ShapeDtypeStruct((B, 1, S), jnp.float32),       # attention weights
    )
    logits_pad, h_new, c_new, attn = pl.pallas_call(
        kernel,
        out_shape=out_shape,
        in_specs=[vmem] * 11,
        out_specs=(vmem, vmem, vmem, vmem),
    )(emb, hidden, cell, encoder_outputs,
      prepped["w1_t"], prepped["w2_t"], prepped["v"],
      prepped["w_x_t"], prepped["bias"], prepped["fc_w_t"], prepped["fc_b"])

    return logits_pad[:, :V], h_new, c_new, attn.reshape(B, S)


# ---------------------------------------------------------------------------
# Pure-JAX reference (mirrors the PyTorch forward) for a correctness check.
# ---------------------------------------------------------------------------
def decoder_rnn_reference(input_token, hidden, cell, encoder_outputs, params):
    H = hidden.shape[1]
    emb = params["embedding"][input_token]
    w1h = hidden @ params["W1"].T
    w2e = jnp.einsum("bsh,gh->bsg", encoder_outputs, params["W2"])
    energy = jnp.einsum("bsh,oh->bso", jnp.tanh(w1h[:, None, :] + w2e),
                        params["v"])[..., 0]
    attn = jax.nn.softmax(energy, axis=1)
    ctx = jnp.einsum("bs,bsh->bh", attn, encoder_outputs)
    x = jnp.concatenate([emb, ctx], axis=1)
    gates = (x @ params["w_ih"].T + params["b_ih"]
             + hidden @ params["w_hh"].T + params["b_hh"])
    i = jax.nn.sigmoid(gates[:, :H])
    f = jax.nn.sigmoid(gates[:, H:2 * H])
    g = jnp.tanh(gates[:, 2 * H:3 * H])
    o = jax.nn.sigmoid(gates[:, 3 * H:4 * H])
    c_new = f * cell + i * g
    h_new = o * jnp.tanh(c_new)
    logits = h_new @ params["fc_w"].T + params["fc_b"]
    return logits, h_new, c_new, attn


# ---------------------------------------------------------------------------
if __name__ == "__main__":
    VOCAB, EMBED, HIDDEN, PAD_IDX = 64, 16, 32, 0
    B, S = 2, 8

    key = jax.random.PRNGKey(0)
    keys = jax.random.split(key, 12)

    embedding = 0.1 * jax.random.normal(keys[0], (VOCAB, EMBED), jnp.float32)
    embedding = embedding.at[PAD_IDX].set(0.0)           # padding_idx row = 0

    params = {
        "embedding": embedding,
        "W1": 0.1 * jax.random.normal(keys[1], (HIDDEN, HIDDEN), jnp.float32),
        "W2": 0.1 * jax.random.normal(keys[2], (HIDDEN, HIDDEN), jnp.float32),
        "v": 0.1 * jax.random.normal(keys[3], (1, HIDDEN), jnp.float32),
        "w_ih": 0.1 * jax.random.normal(keys[4], (4 * HIDDEN, EMBED + HIDDEN), jnp.float32),
        "w_hh": 0.1 * jax.random.normal(keys[5], (4 * HIDDEN, HIDDEN), jnp.float32),
        "b_ih": 0.1 * jax.random.normal(keys[6], (4 * HIDDEN,), jnp.float32),
        "b_hh": 0.1 * jax.random.normal(keys[7], (4 * HIDDEN,), jnp.float32),
        "fc_w": 0.1 * jax.random.normal(keys[8], (VOCAB, HIDDEN), jnp.float32),
        "fc_b": 0.1 * jax.random.normal(keys[9], (VOCAB,), jnp.float32),
    }

    input_token = jax.random.randint(keys[10], (B,), 0, VOCAB, dtype=jnp.int32)
    h0 = 0.1 * jax.random.normal(keys[11], (B, HIDDEN), jnp.float32)
    c0 = 0.1 * jax.random.normal(jax.random.PRNGKey(1), (B, HIDDEN), jnp.float32)
    encoder_outputs = 0.1 * jax.random.normal(
        jax.random.PRNGKey(2), (B, S, HIDDEN), jnp.float32)

    # Weight prep once (not per step), then jit the per-step path.
    prepped = prepare_decoder_params(params)
    step = jax.jit(decoder_rnn_forward)

    outs = step(input_token, h0, c0, encoder_outputs, prepped)
    outs = jax.block_until_ready(outs)

    refs = decoder_rnn_reference(input_token, h0, c0, encoder_outputs, params)
    for got, want in zip(outs, refs):
        np.testing.assert_allclose(np.asarray(got), np.asarray(want),
                                   rtol=2e-5, atol=2e-5)

    print("KERNEL_OK")
</pallas_src>

<mosaic_0001>
module attributes {stable_mosaic.version = 11 : i64} {
  func.func @_decoder_step_kernel(%arg0: memref<2x16xf32, #tpu.memory_space<vmem>>, %arg1: memref<2x32xf32, #tpu.memory_space<vmem>>, %arg2: memref<2x32xf32, #tpu.memory_space<vmem>>, %arg3: memref<2x8x32xf32, #tpu.memory_space<vmem>>, %arg4: memref<32x32xf32, #tpu.memory_space<vmem>>, %arg5: memref<32x32xf32, #tpu.memory_space<vmem>>, %arg6: memref<1x32xf32, #tpu.memory_space<vmem>>, %arg7: memref<80x128xf32, #tpu.memory_space<vmem>>, %arg8: memref<1x128xf32, #tpu.memory_space<vmem>>, %arg9: memref<32x128xf32, #tpu.memory_space<vmem>>, %arg10: memref<1x128xf32, #tpu.memory_space<vmem>>, %arg11: memref<2x128xf32, #tpu.memory_space<vmem>>, %arg12: memref<2x32xf32, #tpu.memory_space<vmem>>, %arg13: memref<2x32xf32, #tpu.memory_space<vmem>>, %arg14: memref<2x1x8xf32, #tpu.memory_space<vmem>>) attributes {dimension_semantics = [], scalar_prefetch = 0 : i64, scratch_operands = 0 : i64, tpu.core_type = #tpu.core_type<tc>} {
    %c0 = arith.constant 0 : index
    %c0_0 = arith.constant 0 : index
    %0 = vector.load %arg1[%c0, %c0_0] : memref<2x32xf32, #tpu.memory_space<vmem>>, vector<2x32xf32>
    %c0_1 = arith.constant 0 : index
    %c0_2 = arith.constant 0 : index
    %1 = vector.load %arg2[%c0_1, %c0_2] : memref<2x32xf32, #tpu.memory_space<vmem>>, vector<2x32xf32>
    %c0_3 = arith.constant 0 : index
    %c0_4 = arith.constant 0 : index
    %c0_5 = arith.constant 0 : index
    %2 = vector.load %arg3[%c0_3, %c0_4, %c0_5] : memref<2x8x32xf32, #tpu.memory_space<vmem>>, vector<2x8x32xf32>
    %3 = vector.shape_cast %2 : vector<2x8x32xf32> to vector<16x32xf32>
    %c0_6 = arith.constant 0 : index
    %c0_7 = arith.constant 0 : index
    %4 = vector.load %arg4[%c0_6, %c0_7] : memref<32x32xf32, #tpu.memory_space<vmem>>, vector<32x32xf32>
    %cst = arith.constant dense<0.000000e+00> : vector<2x32xf32>
    %5 = tpu.matmul %0, %4, %cst {dimension_numbers = #tpu.dot_dimension_numbers<[1], [0], [0], [1], [0, 0, 1, 1], [], []>} : vector<2x32xf32>, vector<32x32xf32>, vector<2x32xf32> -> vector<2x32xf32>
    %c0_8 = arith.constant 0 : index
    %c0_9 = arith.constant 0 : index
    %6 = vector.load %arg5[%c0_8, %c0_9] : memref<32x32xf32, #tpu.memory_space<vmem>>, vector<32x32xf32>
    %cst_10 = arith.constant dense<0.000000e+00> : vector<16x32xf32>
    %7 = tpu.matmul %3, %6, %cst_10 {dimension_numbers = #tpu.dot_dimension_numbers<[1], [0], [0], [1], [0, 0, 1, 1], [], []>} : vector<16x32xf32>, vector<32x32xf32>, vector<16x32xf32> -> vector<16x32xf32>
    %8 = tpu.iota {dimensions = array<i32: 0>} : vector<16x2xi32>
    %9 = tpu.iota {dimensions = array<i32: 1>} : vector<16x2xi32>
    %c8_i32 = arith.constant 8 : i32
    %10 = vector.broadcast %c8_i32 : i32 to vector<16x2xi32>
    %11 = arith.muli %9, %10 : vector<16x2xi32>
    %12 = arith.cmpi sge, %8, %11 : vector<16x2xi32>
    %c1_i32 = arith.constant 1 : i32
    %13 = vector.broadcast %c1_i32 : i32 to vector<16x2xi32>
    %14 = arith.addi %9, %13 : vector<16x2xi32>
    %c8_i32_11 = arith.constant 8 : i32
    %15 = vector.broadcast %c8_i32_11 : i32 to vector<16x2xi32>
    %16 = arith.muli %14, %15 : vector<16x2xi32>
    %17 = arith.cmpi slt, %8, %16 : vector<16x2xi32>
    %18 = arith.andi %12, %17 : vector<16x2xi1>
    %19 = arith.extui %18 : vector<16x2xi1> to vector<16x2xi32>
    %20 = arith.sitofp %19 : vector<16x2xi32> to vector<16x2xf32>
    %cst_12 = arith.constant dense<0.000000e+00> : vector<16x32xf32>
    %21 = tpu.matmul %20, %5, %cst_12 {dimension_numbers = #tpu.dot_dimension_numbers<[1], [0], [0], [1], [0, 0, 1, 1], [], []>} : vector<16x2xf32>, vector<2x32xf32>, vector<16x32xf32> -> vector<16x32xf32>
    %22 = arith.addf %7, %21 : vector<16x32xf32>
    %23 = math.tanh %22 : vector<16x32xf32>
    %24 = vector.shape_cast %23 : vector<16x32xf32> to vector<2x8x32xf32>
    %c0_13 = arith.constant 0 : index
    %c0_14 = arith.constant 0 : index
    %25 = vector.load %arg6[%c0_13, %c0_14] : memref<1x32xf32, #tpu.memory_space<vmem>>, vector<1x32xf32>
    %26 = vector.shape_cast %25 : vector<1x32xf32> to vector<1x1x32xf32>
    %27 = vector.shape_cast %26 : vector<1x1x32xf32> to vector<1x1x32xf32>
    %28 = vector.broadcast %27 : vector<1x1x32xf32> to vector<2x1x32xf32>
    "tpu.trace_start"() <{level = 10 : i32, message = "bqh,bsh->bqs"}> : () -> ()
    %cst_15 = arith.constant dense<0.000000e+00> : vector<2x1x8xf32>
    %29 = tpu.matmul %28, %24, %cst_15 {dimension_numbers = #tpu.dot_dimension_numbers<[2], [2], [1], [1], [0, 0, 0, 1, 1, 1], [0], [0]>} : vector<2x1x32xf32>, vector<2x8x32xf32>, vector<2x1x8xf32> -> vector<2x1x8xf32>
    "tpu.trace_stop"() : () -> ()
    %cst_16 = arith.constant dense<0xFF800000> : vector<2x1xf32>
    %30 = vector.multi_reduction <maximumf>, %29, %cst_16 [2] : vector<2x1x8xf32> to vector<2x1xf32>
    %31 = vector.shape_cast %30 : vector<2x1xf32> to vector<2x1x1xf32>
    %32 = vector.broadcast %31 : vector<2x1x1xf32> to vector<2x1x8xf32>
    %33 = arith.subf %29, %32 : vector<2x1x8xf32>
    %34 = math.exp %33 : vector<2x1x8xf32>
    %cst_17 = arith.constant dense<0.000000e+00> : vector<2x1xf32>
    %35 = vector.multi_reduction <add>, %34, %cst_17 [2] : vector<2x1x8xf32> to vector<2x1xf32>
    %36 = vector.shape_cast %35 : vector<2x1xf32> to vector<2x1x1xf32>
    %37 = vector.broadcast %36 : vector<2x1x1xf32> to vector<2x1x8xf32>
    %38 = arith.divf %34, %37 : vector<2x1x8xf32>
    %c0_18 = arith.constant 0 : index
    %c0_19 = arith.constant 0 : index
    %c0_20 = arith.constant 0 : index
    %39 = vector.load %arg14[%c0_18, %c0_19, %c0_20] : memref<2x1x8xf32, #tpu.memory_space<vmem>>, vector<2x1x8xf32>
    tpu.vector_store %arg14[%c0_18, %c0_19, %c0_20], %38 {strides = array<i32>} : memref<2x1x8xf32, #tpu.memory_space<vmem>>, vector<2x1x8xf32>,
    "tpu.trace_start"() <{level = 10 : i32, message = "bqs,bsh->bqh"}> : () -> ()
    %cst_21 = arith.constant dense<0.000000e+00> : vector<2x1x32xf32>
    %40 = tpu.matmul %38, %2, %cst_21 {dimension_numbers = #tpu.dot_dimension_numbers<[2], [1], [1], [2], [0, 0, 0, 1, 1, 2], [0], [0]>} : vector<2x1x8xf32>, vector<2x8x32xf32>, vector<2x1x32xf32> -> vector<2x1x32xf32>
    "tpu.trace_stop"() : () -> ()
    %41 = vector.extract_strided_slice %40 {offsets = [0, 0, 0], sizes = [1, 1, 32], strides = [1, 1, 1]} : vector<2x1x32xf32> to vector<1x1x32xf32>
    %42 = vector.shape_cast %41 : vector<1x1x32xf32> to vector<1x32xf32>
    %43 = vector.extract_strided_slice %40 {offsets = [1, 0, 0], sizes = [1, 1, 32], strides = [1, 1, 1]} : vector<2x1x32xf32> to vector<1x1x32xf32>
    %44 = vector.shape_cast %43 : vector<1x1x32xf32> to vector<1x32xf32>
    %45 = tpu.concatenate %42, %44 in 0 : vector<1x32xf32>, vector<1x32xf32> -> vector<2x32xf32>
    %c0_22 = arith.constant 0 : index
    %c0_23 = arith.constant 0 : index
    %46 = vector.load %arg0[%c0_22, %c0_23] : memref<2x16xf32, #tpu.memory_space<vmem>>, vector<2x16xf32>
    %47 = tpu.concatenate %46, %45, %0 in 1 : vector<2x16xf32>, vector<2x32xf32>, vector<2x32xf32> -> vector<2x80xf32>
    %c0_24 = arith.constant 0 : index
    %c0_25 = arith.constant 0 : index
    %48 = vector.load %arg7[%c0_24, %c0_25] : memref<80x128xf32, #tpu.memory_space<vmem>>, vector<80x128xf32>
    %cst_26 = arith.constant dense<0.000000e+00> : vector<2x128xf32>
    %49 = tpu.matmul %47, %48, %cst_26 {dimension_numbers = #tpu.dot_dimension_numbers<[1], [0], [0], [1], [0, 0, 1, 1], [], []>} : vector<2x80xf32>, vector<80x128xf32>, vector<2x128xf32> -> vector<2x128xf32>
    %c0_27 = arith.constant 0 : index
    %c0_28 = arith.constant 0 : index
    %50 = vector.load %arg8[%c0_27, %c0_28] : memref<1x128xf32, #tpu.memory_space<vmem>>, vector<1x128xf32>
    %51 = vector.broadcast %50 : vector<1x128xf32> to vector<2x128xf32>
    %52 = arith.addf %49, %51 : vector<2x128xf32>
    %53 = vector.extract_strided_slice %52 {offsets = [0, 0], sizes = [2, 32], strides = [1, 1]} : vector<2x128xf32> to vector<2x32xf32>
    %54 = arith.negf %53 : vector<2x32xf32>
    %55 = math.exp %54 : vector<2x32xf32>
    %cst_29 = arith.constant 1.000000e+00 : f32
    %56 = vector.broadcast %cst_29 : f32 to vector<2x32xf32>
    %57 = arith.addf %56, %55 : vector<2x32xf32>
    %58 = arith.divf %56, %57 : vector<2x32xf32>
    %59 = vector.extract_strided_slice %52 {offsets = [0, 32], sizes = [2, 32], strides = [1, 1]} : vector<2x128xf32> to vector<2x32xf32>
    %60 = arith.negf %59 : vector<2x32xf32>
    %61 = math.exp %60 : vector<2x32xf32>
    %cst_30 = arith.constant 1.000000e+00 : f32
    %62 = vector.broadcast %cst_30 : f32 to vector<2x32xf32>
    %63 = arith.addf %62, %61 : vector<2x32xf32>
    %64 = arith.divf %62, %63 : vector<2x32xf32>
    %65 = vector.extract_strided_slice %52 {offsets = [0, 64], sizes = [2, 32], strides = [1, 1]} : vector<2x128xf32> to vector<2x32xf32>
    %66 = math.tanh %65 : vector<2x32xf32>
    %67 = vector.extract_strided_slice %52 {offsets = [0, 96], sizes = [2, 32], strides = [1, 1]} : vector<2x128xf32> to vector<2x32xf32>
    %68 = arith.negf %67 : vector<2x32xf32>
    %69 = math.exp %68 : vector<2x32xf32>
    %cst_31 = arith.constant 1.000000e+00 : f32
    %70 = vector.broadcast %cst_31 : f32 to vector<2x32xf32>
    %71 = arith.addf %70, %69 : vector<2x32xf32>
    %72 = arith.divf %70, %71 : vector<2x32xf32>
    %73 = arith.mulf %64, %1 : vector<2x32xf32>
    %74 = arith.mulf %58, %66 : vector<2x32xf32>
    %75 = arith.addf %73, %74 : vector<2x32xf32>
    %76 = math.tanh %75 : vector<2x32xf32>
    %77 = arith.mulf %72, %76 : vector<2x32xf32>
    %c0_32 = arith.constant 0 : index
    %c0_33 = arith.constant 0 : index
    %78 = vector.load %arg13[%c0_32, %c0_33] : memref<2x32xf32, #tpu.memory_space<vmem>>, vector<2x32xf32>
    tpu.vector_store %arg13[%c0_32, %c0_33], %75 {strides = array<i32>} : memref<2x32xf32, #tpu.memory_space<vmem>>, vector<2x32xf32>,
    %c0_34 = arith.constant 0 : index
    %c0_35 = arith.constant 0 : index
    %79 = vector.load %arg12[%c0_34, %c0_35] : memref<2x32xf32, #tpu.memory_space<vmem>>, vector<2x32xf32>
    tpu.vector_store %arg12[%c0_34, %c0_35], %77 {strides = array<i32>} : memref<2x32xf32, #tpu.memory_space<vmem>>, vector<2x32xf32>,
    %c0_36 = arith.constant 0 : index
    %c0_37 = arith.constant 0 : index
    %80 = vector.load %arg9[%c0_36, %c0_37] : memref<32x128xf32, #tpu.memory_space<vmem>>, vector<32x128xf32>
    %cst_38 = arith.constant dense<0.000000e+00> : vector<2x128xf32>
    %81 = tpu.matmul %77, %80, %cst_38 {dimension_numbers = #tpu.dot_dimension_numbers<[1], [0], [0], [1], [0, 0, 1, 1], [], []>} : vector<2x32xf32>, vector<32x128xf32>, vector<2x128xf32> -> vector<2x128xf32>
    %c0_39 = arith.constant 0 : index
    %c0_40 = arith.constant 0 : index
    %82 = vector.load %arg10[%c0_39, %c0_40] : memref<1x128xf32, #tpu.memory_space<vmem>>, vector<1x128xf32>
    %83 = vector.broadcast %82 : vector<1x128xf32> to vector<2x128xf32>
    %84 = arith.addf %81, %83 : vector<2x128xf32>
    %c0_41 = arith.constant 0 : index
    %c0_42 = arith.constant 0 : index
    %85 = vector.load %arg11[%c0_41, %c0_42] : memref<2x128xf32, #tpu.memory_space<vmem>>, vector<2x128xf32>
    tpu.vector_store %arg11[%c0_41, %c0_42], %84 {strides = array<i32>} : memref<2x128xf32, #tpu.memory_space<vmem>>, vector<2x128xf32>,
    return
  }
}

</mosaic_0001>

<llo_original>
// kernel: decoder_rnn_forward.1
$region0: #{decoder_rnn_forward.1}
  #allocation0 [shape = 'u32[]', space=smem, size = 0x4, offset = 0x4, fixed_abs, tag = 'smem constant byte address 0x4 - core index']
  #allocation1 [shape = 'u32[144,128]{1,0:T(1,128)}', space=vmem, size = 0x12000, scoped, tag = 'internal scratch']
  %s0 = inlined_call_operand.vmem [shape: f32[2,16], index: 0, kind: input, shape index: {}]
  %s1 = inlined_call_operand.vmem [shape: f32[2,32], index: 1, kind: input, shape index: {}]
  %s2 = inlined_call_operand.vmem [shape: f32[2,32], index: 2, kind: input, shape index: {}]
  %s3 = inlined_call_operand.hbm [shape: f32[2,8,32], index: 3, kind: input, shape index: {}]
  %s4 = inlined_call_operand.vmem [shape: f32[32,32], index: 4, kind: input, shape index: {}]
  %s5 = inlined_call_operand.vmem [shape: f32[32,32], index: 5, kind: input, shape index: {}]
  %s6 = inlined_call_operand.vmem [shape: f32[1,32], index: 6, kind: input, shape index: {}]
  %s7 = inlined_call_operand.vmem [shape: f32[80,128], index: 7, kind: input, shape index: {}]
  %s8 = inlined_call_operand.vmem [shape: f32[1,128], index: 8, kind: input, shape index: {}]
  %s9 = inlined_call_operand.hbm [shape: f32[32,128], index: 9, kind: input, shape index: {}]
  %s10 = inlined_call_operand.vmem [shape: f32[1,128], index: 10, kind: input, shape index: {}]
  %s11 = inlined_call_operand.hbm [shape: f32[2,128], index: 11, kind: output, shape index: {0}]
  %s12 = inlined_call_operand.hbm [shape: f32[2,32], index: 12, kind: output, shape index: {1}]
  %s13 = inlined_call_operand.hbm [shape: f32[2,32], index: 13, kind: output, shape index: {2}]
  %s14 = inlined_call_operand.hbm [shape: f32[2,1,8], index: 14, kind: output, shape index: {3}]
  %15 = xla_tuple %s11, %s12, %s13, %s14
  %s16 = sld [smem:[#allocation0]]
  $region86: #{decoder_rnn_forward.1} parent=0
    _
  %s18 = ssub.s32 1, %s16
  %s19 = scalar_select 0, %s18, %s16
  $region1: #{decoder_rnn_forward.1} parent=0
    #allocation2 [shape = 'u8[8192]{0}', space=vmem, size = 0x2000, scoped, tag = 'input window, operand 3, single buffered']
    #allocation3 [shape = 's32[1]{0}', space=sflag, size = 0x4, scoped, tag = 'scoped memory for decoder_rnn_forward.1']
    #allocation4 [shape = 's32[1]{0}', space=sflag, size = 0x4, scoped, tag = 'scoped memory for decoder_rnn_forward.1']
    #allocation5 [shape = 'u8[16384]{0}', space=vmem, size = 0x4000, scoped, tag = 'input window, operand 9, single buffered']
    #allocation6 [shape = 's32[1]{0}', space=sflag, size = 0x4, scoped, tag = 'scoped memory for decoder_rnn_forward.1']
    #allocation7 [shape = 'u8[1024]{0}', space=vmem, size = 0x400, scoped, tag = 'output window, operand 0, single buffered']
    #allocation8 [shape = 'u8[1024]{0}', space=vmem, size = 0x400, scoped, tag = 'output window, operand 1, single buffered']
    #allocation9 [shape = 's32[1]{0}', space=sflag, size = 0x4, scoped, tag = 'scoped memory for decoder_rnn_forward.1']
    #allocation10 [shape = 'u8[1024]{0}', space=vmem, size = 0x400, scoped, tag = 'output window, operand 2, single buffered']
    #allocation11 [shape = 'u8[1024]{0}', space=vmem, size = 0x400, scoped, tag = 'output window, operand 3, single buffered']
    #allocation12 [shape = 's32[1]{0}', space=sflag, size = 0x4, scoped, tag = 'scoped memory for decoder_rnn_forward.1']
    %20 = vsyncpa [#allocation3], 0
    %21 = vsyncpa [#allocation6], 0
    %22 = vsyncpa [#allocation4], 0
    %23 = vsyncpa [#allocation9], 0
    %24 = vsyncpa [#allocation12], 0
    // Predicated region
    $region2: #{decoder_rnn_forward.1} parent=1 // pred_check
      _
    $region3: #{decoder_rnn_forward.1} parent=1 // pred_check_branch
      %26 = sbr.rel (0) target = $region5
    $region4: #{decoder_rnn_forward.1} parent=1 // pred_region
      _
    $region5: #{decoder_rnn_forward.1} parent=1 // pred_fallthru
      _
    // Predicated region
    $region6: #{decoder_rnn_forward.1} parent=1 // pred_check
      _
    $region7: #{decoder_rnn_forward.1} parent=1 // pred_check_branch
      %28 = sbr.rel (0) target = $region9
    $region8: #{decoder_rnn_forward.1} parent=1 // pred_region
      _
    $region9: #{decoder_rnn_forward.1} parent=1 // pred_fallthru
      _
    // Predicated region
    $region10: #{decoder_rnn_forward.1} parent=1 // pred_check
      _
    $region11: #{decoder_rnn_forward.1} parent=1 // pred_check_branch
      %30 = sbr.rel (0) target = $region13
    $region12: #{decoder_rnn_forward.1} parent=1 // pred_region
      _
    $region13: #{decoder_rnn_forward.1} parent=1 // pred_fallthru
      _
    // Predicated region
    $region14: #{decoder_rnn_forward.1} parent=1 // pred_check
      _
    $region15: #{decoder_rnn_forward.1} parent=1 // pred_check_branch
      %32 = sbr.rel (0) target = $region17
    $region16: #{decoder_rnn_forward.1} parent=1 // pred_region
      %s34 = ssub.s32 256, 256
      %35 = vsyncadd [#allocation3], %s34
      %s36 = sshll.u32 [#allocation2], 4
      %s37 = int_to_ptr.vmem [resolvable:$true] %s36
      %42 = dma.hbm_to_vmem [thread:$0]  %s3, 256, %s37, [#allocation3], 128, 128, 8
    $region17: #{decoder_rnn_forward.1} parent=1 // pred_fallthru
      _
    // Predicated region
    $region18: #{decoder_rnn_forward.1} parent=1 // pred_check
      _
    $region19: #{decoder_rnn_forward.1} parent=1 // pred_check_branch
      %44 = sbr.rel (0) target = $region21
    $region20: #{decoder_rnn_forward.1} parent=1 // pred_region
      _
    $region21: #{decoder_rnn_forward.1} parent=1 // pred_fallthru
      _
    // Predicated region
    $region22: #{decoder_rnn_forward.1} parent=1 // pred_check
      _
    $region23: #{decoder_rnn_forward.1} parent=1 // pred_check_branch
      %46 = sbr.rel (0) target = $region25
    $region24: #{decoder_rnn_forward.1} parent=1 // pred_region
      _
    $region25: #{decoder_rnn_forward.1} parent=1 // pred_fallthru
      _
    // Predicated region
    $region26: #{decoder_rnn_forward.1} parent=1 // pred_check
      _
    $region27: #{decoder_rnn_forward.1} parent=1 // pred_check_branch
      %48 = sbr.rel (0) target = $region29
    $region28: #{decoder_rnn_forward.1} parent=1 // pred_region
      _
    $region29: #{decoder_rnn_forward.1} parent=1 // pred_fallthru
      _
    // Predicated region
    $region30: #{decoder_rnn_forward.1} parent=1 // pred_check
      _
    $region31: #{decoder_rnn_forward.1} parent=1 // pred_check_branch
      %50 = sbr.rel (0) target = $region33
    $region32: #{decoder_rnn_forward.1} parent=1 // pred_region
      _
    $region33: #{decoder_rnn_forward.1} parent=1 // pred_fallthru
      _
    // Predicated region
    $region34: #{decoder_rnn_forward.1} parent=1 // pred_check
      _
    $region35: #{decoder_rnn_forward.1} parent=1 // pred_check_branch
      %52 = sbr.rel (0) target = $region37
    $region36: #{decoder_rnn_forward.1} parent=1 // pred_region
      _
    $region37: #{decoder_rnn_forward.1} parent=1 // pred_fallthru
      _
    // Predicated region
    $region38: #{decoder_rnn_forward.1} parent=1 // pred_check
      _
    $region39: #{decoder_rnn_forward.1} parent=1 // pred_check_branch
      %54 = sbr.rel (0) target = $region41
    $region40: #{decoder_rnn_forward.1} parent=1 // pred_region
      %s56 = ssub.s32 512, 512
      %57 = vsyncadd [#allocation6], %s56
      %s58 = sshll.u32 [#allocation5], 4
      %s59 = int_to_ptr.vmem [resolvable:$true] %s58
      %64 = dma.hbm_to_vmem [thread:$0]  %s9, 512, %s59, [#allocation6], 128, 128, 8
    $region41: #{decoder_rnn_forward.1} parent=1 // pred_fallthru
      _
    // Predicated region
    $region42: #{decoder_rnn_forward.1} parent=1 // pred_check
      _
    $region43: #{decoder_rnn_forward.1} parent=1 // pred_check_branch
      %66 = sbr.rel (0) target = $region45
    $region44: #{decoder_rnn_forward.1} parent=1 // pred_region
      _
    $region45: #{decoder_rnn_forward.1} parent=1 // pred_fallthru
      _
    // Predicated region
    $region46: #{decoder_rnn_forward.1} parent=1 // pred_check
      _
    $region47: #{decoder_rnn_forward.1} parent=1 // pred_check_branch
      %68 = sbr.rel (0) target = $region49
    $region48: #{decoder_rnn_forward.1} parent=1 // pred_region
      %69 = dma.done [#allocation3], 256
    $region49: #{decoder_rnn_forward.1} parent=1 // pred_fallthru
      _
    // Predicated region
    $region50: #{decoder_rnn_forward.1} parent=1 // pred_check
      _
    $region51: #{decoder_rnn_forward.1} parent=1 // pred_check_branch
      %71 = sbr.rel (0) target = $region53
    $region52: #{decoder_rnn_forward.1} parent=1 // pred_region
      %72 = dma.done [#allocation6], 512
    $region53: #{decoder_rnn_forward.1} parent=1 // pred_fallthru
      _
    %v73 = vld [vmem:[%s1] sm:$0x3]
    %v74 = vld [vmem:[%s2] sm:$0x3]
    %v75 = vld [vmem:[#allocation2] sm:$0xff]
    %v76 = vld [vmem:[#allocation2 + $0x8] sm:$0xff]
    %v77 = vld [vmem:[%s4] sm:$0xff]
    %v78 = vld [vmem:[%s4 + $0x8] sm:$0xff]
    %v79 = vld [vmem:[%s4 + $0x10] sm:$0xff]
    %v80 = vld [vmem:[%s4 + $0x18] sm:$0xff]
    %vm81 = vcmask 261120
    %v83 = vsel %vm81, %v73, 0
    %85 = vmatprep.subr.mxu0 0.0
    %86 = vmatpush1.msra.mxu0 %v77
    %87 = vmatprep.subr.mxu0 0.0
    %88 = vmatpush1.msra.mxu0 %v78
    %89 = vmatprep.subr.mxu0 0.0
    %90 = vmatpush1.msra.mxu0 %v79
    %91 = vmatprep.subr.mxu0 0.0
    %92 = vmatpush1.msra.mxu0 %v80
    %93 = vmatprep.subr.mxu0 0.0
    %94 = vmatpush1.msra.mxu0 0.0
    %95 = vmatprep.subr.mxu0 0.0
    %96 = vmatpush1.msra.mxu0 0.0
    %97 = vmatprep.subr.mxu0 0.0
    %98 = vmatpush1.msra.mxu0 0.0
    %99 = vmatprep.subr.mxu0 0.0
    %100 = vmatpush1.msra.mxu0 0.0
    %101 = vmatprep.subr.mxu0 0.0
    %102 = vmatpush1.msra.mxu0 0.0
    %103 = vmatprep.subr.mxu0 0.0
    %104 = vmatpush1.msra.mxu0 0.0
    %105 = vmatprep.subr.mxu0 0.0
    %106 = vmatpush1.msra.mxu0 0.0
    %107 = vmatprep.subr.mxu0 0.0
    %108 = vmatpush1.msra.mxu0 0.0
    %109 = vmatprep.subr.mxu0 0.0
    %110 = vmatpush1.msra.mxu0 0.0
    %111 = vmatprep.subr.mxu0 0.0
    %112 = vmatpush1.msra.mxu0 0.0
    %113 = vmatprep.subr.mxu0 0.0
    %114 = vmatpush1.msra.mxu0 0.0
    %115 = vmatprep.subr.mxu0 0.0
    %116 = vmatpush1.msra.mxu0 0.0
    %117 = vmatprep.subr.mxu0 0.0
    %118 = vmatpush1.msra.mxu0 0.0
    %119 = vmatprep.subr.mxu0 0.0
    %120 = vmatpush1.msra.mxu0 0.0
    %121 = vmatprep.subr.mxu0 0.0
    %122 = vmatpush1.msra.mxu0 0.0
    %123 = vmatprep.subr.mxu0 0.0
    %124 = vmatpush1.msra.mxu0 0.0
    %125 = vmatprep.subr.mxu0 0.0
    %126 = vmatpush1.msra.mxu0 0.0
    %127 = vmatprep.subr.mxu0 0.0
    %128 = vmatpush1.msra.mxu0 0.0
    %129 = vmatprep.subr.mxu0 0.0
    %130 = vmatpush1.msra.mxu0 0.0
    %131 = vmatprep.subr.mxu0 0.0
    %132 = vmatpush1.msra.mxu0 0.0
    %133 = vmatprep.subr.mxu0 0.0
    %134 = vmatpush1.msra.mxu0 0.0
    %135 = vmatprep.subr.mxu0 0.0
    %136 = vmatpush1.msra.mxu0 0.0
    %137 = vmatprep.subr.mxu0 0.0
    %138 = vmatpush1.msra.mxu0 0.0
    %139 = vmatprep.subr.mxu0 0.0
    %140 = vmatpush1.msra.mxu0 0.0
    %141 = vmatprep.subr.mxu0 0.0
    %142 = vmatpush1.msra.mxu0 0.0
    %143 = vmatprep.subr.mxu0 0.0
    %144 = vmatpush1.msra.mxu0 0.0
    %145 = vmatprep.subr.mxu0 0.0
    %146 = vmatpush1.msra.mxu0 0.0
    %147 = vmatprep.subr.mxu0 0.0
    %148 = vmatpush1.msra.mxu0 0.0
    %149 = vmatprep.mubr.f32.mxu0 0.0
    %150 = vmatmul.mubr.f32.gmra.mrb[0].mxu0 %v83
    %v151 = vpop.f32.mrb[0].mxu0
    %v152 = vadd.f32 0.0, %v151
    %v153 = vpop.f32.mrb[0].mxu0
    %154 = vdwg.mxu0
    %v155 = vld [vmem:[%s5] sm:$0xff]
    %v156 = vld [vmem:[%s5 + $0x8] sm:$0xff]
    %v157 = vld [vmem:[%s5 + $0x10] sm:$0xff]
    %v158 = vld [vmem:[%s5 + $0x18] sm:$0xff]
    %v159 = vlaneseq
    %v160 = vshrl.u32 %v159, 7
    %v161 = vadd.s32 %v160, 8
    %v162 = vlaneseq
    %v163 = vand.u32 %v162, 127
    %v164 = vmul.u32 %v163, 8
    %vm165 = vcmp.ge.s32.totalorder %v160, %v164
    %vm166 = vcmp.ge.s32.totalorder %v161, %v164
    %v167 = vadd.s32 %v163, 1
    %v168 = vmul.u32 %v167, 8
    %vm169 = vcmp.lt.s32.totalorder %v160, %v168
    %vm170 = vcmp.lt.s32.totalorder %v161, %v168
    %vm171 = vmand %vm165, %vm169
    %vm172 = vmand %vm166, %vm170
    %v173 = vsel %vm171, 1, 0
    %v174 = vsel %vm172, 1, 0
    %v175 = vcvt.s32.f32 %v173
    %v176 = vcvt.s32.f32 %v174
    %vm177 = vcmask 15360
    %v179 = vsel %vm177, %v175, 0
    %v182 = vsel %vm177, %v176, 0
    %vm184 = vcmask 1041408
    %v186 = vsel %vm184, %v152, 0
    %188 = vmatprep.subr.mxu0 0.0
    %189 = vmatpush1.msra.mxu0 %v186
    %190 = vmatprep.subr.mxu0 0.0
    %191 = vmatpush1.msra.mxu0 0.0
    %192 = vmatprep.subr.mxu0 0.0
    %193 = vmatpush1.msra.mxu0 0.0
    %194 = vmatprep.subr.mxu0 0.0
    %195 = vmatpush1.msra.mxu0 0.0
    %196 = vmatprep.subr.mxu0 0.0
    %197 = vmatpush1.msra.mxu0 0.0
    %198 = vmatprep.subr.mxu0 0.0
    %199 = vmatpush1.msra.mxu0 0.0
    %200 = vmatprep.subr.mxu0 0.0
    %201 = vmatpush1.msra.mxu0 0.0
    %202 = vmatprep.subr.mxu0 0.0
    %203 = vmatpush1.msra.mxu0 0.0
    %204 = vmatprep.subr.mxu0 0.0
    %205 = vmatpush1.msra.mxu0 0.0
    %206 = vmatprep.subr.mxu0 0.0
    %207 = vmatpush1.msra.mxu0 0.0
    %208 = vmatprep.subr.mxu0 0.0
    %209 = vmatpush1.msra.mxu0 0.0
    %210 = vmatprep.subr.mxu0 0.0
    %211 = vmatpush1.msra.mxu0 0.0
    %212 = vmatprep.subr.mxu0 0.0
    %213 = vmatpush1.msra.mxu0 0.0
    %214 = vmatprep.subr.mxu0 0.0
    %215 = vmatpush1.msra.mxu0 0.0
    %216 = vmatprep.subr.mxu0 0.0
    %217 = vmatpush1.msra.mxu0 0.0
    %218 = vmatprep.subr.mxu0 0.0
    %219 = vmatpush1.msra.mxu0 0.0
    %220 = vmatprep.subr.mxu0 0.0
    %221 = vmatpush1.msra.mxu0 0.0
    %222 = vmatprep.subr.mxu0 0.0
    %223 = vmatpush1.msra.mxu0 0.0
    %224 = vmatprep.subr.mxu0 0.0
    %225 = vmatpush1.msra.mxu0 0.0
    %226 = vmatprep.subr.mxu0 0.0
    %227 = vmatpush1.msra.mxu0 0.0
    %228 = vmatprep.subr.mxu0 0.0
    %229 = vmatpush1.msra.mxu0 0.0
    %230 = vmatprep.subr.mxu0 0.0
    %231 = vmatpush1.msra.mxu0 0.0
    %232 = vmatprep.subr.mxu0 0.0
    %233 = vmatpush1.msra.mxu0 0.0
    %234 = vmatprep.subr.mxu0 0.0
    %235 = vmatpush1.msra.mxu0 0.0
    %236 = vmatprep.subr.mxu0 0.0
    %237 = vmatpush1.msra.mxu0 0.0
    %238 = vmatprep.subr.mxu0 0.0
    %239 = vmatpush1.msra.mxu0 0.0
    %240 = vmatprep.subr.mxu0 0.0
    %241 = vmatpush1.msra.mxu0 0.0
    %242 = vmatprep.subr.mxu0 0.0
    %243 = vmatpush1.msra.mxu0 0.0
    %244 = vmatprep.subr.mxu0 0.0
    %245 = vmatpush1.msra.mxu0 0.0
    %246 = vmatprep.subr.mxu0 0.0
    %247 = vmatpush1.msra.mxu0 0.0
    %248 = vmatprep.subr.mxu0 0.0
    %249 = vmatpush1.msra.mxu0 0.0
    %250 = vmatprep.subr.mxu0 0.0
    %251 = vmatpush1.msra.mxu0 0.0
    %252 = vmatprep.mubr.f32.mxu0 0.0
    %253 = vmatmul.mubr.f32.gmra.mrb[0].mxu0 %v179
    %v254 = vpop.f32.mrb[0].mxu0
    %v255 = vadd.f32 0.0, %v254
    %v256 = vpop.f32.mrb[0].mxu0
    %257 = vmatprep.mubr.f32.mxu0 0.0
    %258 = vmatmul.mubr.f32.gmra.mrb[0].mxu0 %v182
    %v259 = vpop.f32.mrb[0].mxu0
    %v260 = vadd.f32 0.0, %v259
    %v261 = vpop.f32.mrb[0].mxu0
    %262 = vdwg.mxu0
    %v264 = vsel %vm81, %v75, 0
    %v267 = vsel %vm81, %v76, 0
    %269 = vmatprep.subr.mxu0 0.0
    %270 = vmatpush1.msra.mxu0 %v155
    %271 = vmatprep.subr.mxu0 0.0
    %272 = vmatpush1.msra.mxu0 %v156
    %273 = vmatprep.subr.mxu0 0.0
    %274 = vmatpush1.msra.mxu0 %v157
    %275 = vmatprep.subr.mxu0 0.0
    %276 = vmatpush1.msra.mxu0 %v158
    %277 = vmatprep.subr.mxu0 0.0
    %278 = vmatpush1.msra.mxu0 0.0
    %279 = vmatprep.subr.mxu0 0.0
    %280 = vmatpush1.msra.mxu0 0.0
    %281 = vmatprep.subr.mxu0 0.0
    %282 = vmatpush1.msra.mxu0 0.0
    %283 = vmatprep.subr.mxu0 0.0
    %284 = vmatpush1.msra.mxu0 0.0
    %285 = vmatprep.subr.mxu0 0.0
    %286 = vmatpush1.msra.mxu0 0.0
    %287 = vmatprep.subr.mxu0 0.0
    %288 = vmatpush1.msra.mxu0 0.0
    %289 = vmatprep.subr.mxu0 0.0
    %290 = vmatpush1.msra.mxu0 0.0
    %291 = vmatprep.subr.mxu0 0.0
    %292 = vmatpush1.msra.mxu0 0.0
    %293 = vmatprep.subr.mxu0 0.0
    %294 = vmatpush1.msra.mxu0 0.0
    %295 = vmatprep.subr.mxu0 0.0
    %296 = vmatpush1.msra.mxu0 0.0
    %297 = vmatprep.subr.mxu0 0.0
    %298 = vmatpush1.msra.mxu0 0.0
    %299 = vmatprep.subr.mxu0 0.0
    %300 = vmatpush1.msra.mxu0 0.0
    %301 = vmatprep.subr.mxu0 0.0
    %302 = vmatpush1.msra.mxu0 0.0
    %303 = vmatprep.subr.mxu0 0.0
    %304 = vmatpush1.msra.mxu0 0.0
    %305 = vmatprep.subr.mxu0 0.0
    %306 = vmatpush1.msra.mxu0 0.0
    %307 = vmatprep.subr.mxu0 0.0
    %308 = vmatpush1.msra.mxu0 0.0
    %309 = vmatprep.subr.mxu0 0.0
    %310 = vmatpush1.msra.mxu0 0.0
    %311 = vmatprep.subr.mxu0 0.0
    %312 = vmatpush1.msra.mxu0 0.0
    %313 = vmatprep.subr.mxu0 0.0
    %314 = vmatpush1.msra.mxu0 0.0
    %315 = vmatprep.subr.mxu0 0.0
    %316 = vmatpush1.msra.mxu0 0.0
    %317 = vmatprep.subr.mxu0 0.0
    %318 = vmatpush1.msra.mxu0 0.0
    %319 = vmatprep.subr.mxu0 0.0
    %320 = vmatpush1.msra.mxu0 0.0
    %321 = vmatprep.subr.mxu0 0.0
    %322 = vmatpush1.msra.mxu0 0.0
    %323 = vmatprep.subr.mxu0 0.0
    %324 = vmatpush1.msra.mxu0 0.0
    %325 = vmatprep.subr.mxu0 0.0
    %326 = vmatpush1.msra.mxu0 0.0
    %327 = vmatprep.subr.mxu0 0.0
    %328 = vmatpush1.msra.mxu0 0.0
    %329 = vmatprep.subr.mxu0 0.0
    %330 = vmatpush1.msra.mxu0 0.0
    %331 = vmatprep.subr.mxu0 0.0
    %332 = vmatpush1.msra.mxu0 0.0
    %333 = vmatprep.mubr.f32.mxu0 0.0
    %334 = vmatmul.mubr.f32.gmra.mrb[0].mxu0 %v264
    %v335 = vpop.f32.mrb[0].mxu0
    %v336 = vadd.f32 %v255, %v335
    %v337 = vpop.f32.mrb[0].mxu0
    %338 = vmatprep.mubr.f32.mxu0 0.0
    %339 = vmatmul.mubr.f32.gmra.mrb[0].mxu0 %v267
    %v340 = vpop.f32.mrb[0].mxu0
    %v341 = vadd.f32 %v260, %v340
    %v342 = vpop.f32.mrb[0].mxu0
    %343 = vdwg.mxu0
    %v344 = vtanh.pop %v336
    %v345 = vtanh.pop %v341
    %v346 = vld [vmem:[%s6] sm:$0x1]
    %v348 = vsel %vm81, %v346, 0
    %v351 = vsel %vm81, %v344, 0
    %353 = vmatprep.subr.mxu0 0.0
    %354 = vmatpush1.xpose.msra.mxu0 %v351
    %355 = vmatprep.subr.mxu0 0.0
    %356 = vmatpush1.xpose.msra.mxu0 0.0
    %357 = vmatprep.subr.mxu0 0.0
    %358 = vmatpush1.xpose.msra.mxu0 0.0
    %359 = vmatprep.subr.mxu0 0.0
    %360 = vmatpush1.xpose.msra.mxu0 0.0
    %361 = vmatprep.subr.mxu0 0.0
    %362 = vmatpush1.xpose.msra.mxu0 0.0
    %363 = vmatprep.subr.mxu0 0.0
    %364 = vmatpush1.xpose.msra.mxu0 0.0
    %365 = vmatprep.subr.mxu0 0.0
    %366 = vmatpush1.xpose.msra.mxu0 0.0
    %367 = vmatprep.subr.mxu0 0.0
    %368 = vmatpush1.xpose.msra.mxu0 0.0
    %369 = vmatprep.subr.mxu0 0.0
    %370 = vmatpush1.xpose.msra.mxu0 0.0
    %371 = vmatprep.subr.mxu0 0.0
    %372 = vmatpush1.xpose.msra.mxu0 0.0
    %373 = vmatprep.subr.mxu0 0.0
    %374 = vmatpush1.xpose.msra.mxu0 0.0
    %375 = vmatprep.subr.mxu0 0.0
    %376 = vmatpush1.xpose.msra.mxu0 0.0
    %377 = vmatprep.subr.mxu0 0.0
    %378 = vmatpush1.xpose.msra.mxu0 0.0
    %379 = vmatprep.subr.mxu0 0.0
    %380 = vmatpush1.xpose.msra.mxu0 0.0
    %381 = vmatprep.subr.mxu0 0.0
    %382 = vmatpush1.xpose.msra.mxu0 0.0
    %383 = vmatprep.subr.mxu0 0.0
    %384 = vmatpush1.xpose.msra.mxu0 0.0
    %385 = vmatprep.subr.mxu0 0.0
    %386 = vmatpush1.xpose.msra.mxu0 0.0
    %387 = vmatprep.subr.mxu0 0.0
    %388 = vmatpush1.xpose.msra.mxu0 0.0
    %389 = vmatprep.subr.mxu0 0.0
    %390 = vmatpush1.xpose.msra.mxu0 0.0
    %391 = vmatprep.subr.mxu0 0.0
    %392 = vmatpush1.xpose.msra.mxu0 0.0
    %393 = vmatprep.subr.mxu0 0.0
    %394 = vmatpush1.xpose.msra.mxu0 0.0
    %395 = vmatprep.subr.mxu0 0.0
    %396 = vmatpush1.xpose.msra.mxu0 0.0
    %397 = vmatprep.subr.mxu0 0.0
    %398 = vmatpush1.xpose.msra.mxu0 0.0
    %399 = vmatprep.subr.mxu0 0.0
    %400 = vmatpush1.xpose.msra.mxu0 0.0
    %401 = vmatprep.subr.mxu0 0.0
    %402 = vmatpush1.xpose.msra.mxu0 0.0
    %403 = vmatprep.subr.mxu0 0.0
    %404 = vmatpush1.xpose.msra.mxu0 0.0
    %405 = vmatprep.subr.mxu0 0.0
    %406 = vmatpush1.xpose.msra.mxu0 0.0
    %407 = vmatprep.subr.mxu0 0.0
    %408 = vmatpush1.xpose.msra.mxu0 0.0
    %409 = vmatprep.subr.mxu0 0.0
    %410 = vmatpush1.xpose.msra.mxu0 0.0
    %411 = vmatprep.subr.mxu0 0.0
    %412 = vmatpush1.xpose.msra.mxu0 0.0
    %413 = vmatprep.subr.mxu0 0.0
    %414 = vmatpush1.xpose.msra.mxu0 0.0
    %415 = vmatprep.subr.mxu0 0.0
    %416 = vmatpush1.xpose.msra.mxu0 0.0
    %417 = vmatprep.mubr.f32.mxu0 0.0
    %418 = vmatmul.mubr.f32.gmra.mrb[0].mxu0 %v348
    %v419 = vpop.f32.mrb[0].mxu0
    %v420 = vadd.f32 0.0, %v419
    %v421 = vpop.f32.mrb[0].mxu0
    %422 = vdwg.mxu0
    %v424 = vsel %vm81, %v345, 0
    %426 = vmatprep.subr.mxu0 0.0
    %427 = vmatpush1.xpose.msra.mxu0 %v424
    %428 = vmatprep.subr.mxu0 0.0
    %429 = vmatpush1.xpose.msra.mxu0 0.0
    %430 = vmatprep.subr.mxu0 0.0
    %431 = vmatpush1.xpose.msra.mxu0 0.0
    %432 = vmatprep.subr.mxu0 0.0
    %433 = vmatpush1.xpose.msra.mxu0 0.0
    %434 = vmatprep.subr.mxu0 0.0
    %435 = vmatpush1.xpose.msra.mxu0 0.0
    %436 = vmatprep.subr.mxu0 0.0
    %437 = vmatpush1.xpose.msra.mxu0 0.0
    %438 = vmatprep.subr.mxu0 0.0
    %439 = vmatpush1.xpose.msra.mxu0 0.0
    %440 = vmatprep.subr.mxu0 0.0
    %441 = vmatpush1.xpose.msra.mxu0 0.0
    %442 = vmatprep.subr.mxu0 0.0
    %443 = vmatpush1.xpose.msra.mxu0 0.0
    %444 = vmatprep.subr.mxu0 0.0
    %445 = vmatpush1.xpose.msra.mxu0 0.0
    %446 = vmatprep.subr.mxu0 0.0
    %447 = vmatpush1.xpose.msra.mxu0 0.0
    %448 = vmatprep.subr.mxu0 0.0
    %449 = vmatpush1.xpose.msra.mxu0 0.0
    %450 = vmatprep.subr.mxu0 0.0
    %451 = vmatpush1.xpose.msra.mxu0 0.0
    %452 = vmatprep.subr.mxu0 0.0
    %453 = vmatpush1.xpose.msra.mxu0 0.0
    %454 = vmatprep.subr.mxu0 0.0
    %455 = vmatpush1.xpose.msra.mxu0 0.0
    %456 = vmatprep.subr.mxu0 0.0
    %457 = vmatpush1.xpose.msra.mxu0 0.0
    %458 = vmatprep.subr.mxu0 0.0
    %459 = vmatpush1.xpose.msra.mxu0 0.0
    %460 = vmatprep.subr.mxu0 0.0
    %461 = vmatpush1.xpose.msra.mxu0 0.0
    %462 = vmatprep.subr.mxu0 0.0
    %463 = vmatpush1.xpose.msra.mxu0 0.0
    %464 = vmatprep.subr.mxu0 0.0
    %465 = vmatpush1.xpose.msra.mxu0 0.0
    %466 = vmatprep.subr.mxu0 0.0
    %467 = vmatpush1.xpose.msra.mxu0 0.0
    %468 = vmatprep.subr.mxu0 0.0
    %469 = vmatpush1.xpose.msra.mxu0 0.0
    %470 = vmatprep.subr.mxu0 0.0
    %471 = vmatpush1.xpose.msra.mxu0 0.0
    %472 = vmatprep.subr.mxu0 0.0
    %473 = vmatpush1.xpose.msra.mxu0 0.0
    %474 = vmatprep.subr.mxu0 0.0
    %475 = vmatpush1.xpose.msra.mxu0 0.0
    %476 = vmatprep.subr.mxu0 0.0
    %477 = vmatpush1.xpose.msra.mxu0 0.0
    %478 = vmatprep.subr.mxu0 0.0
    %479 = vmatpush1.xpose.msra.mxu0 0.0
    %480 = vmatprep.subr.mxu0 0.0
    %481 = vmatpush1.xpose.msra.mxu0 0.0
    %482 = vmatprep.subr.mxu0 0.0
    %483 = vmatpush1.xpose.msra.mxu0 0.0
    %484 = vmatprep.subr.mxu0 0.0
    %485 = vmatpush1.xpose.msra.mxu0 0.0
    %486 = vmatprep.subr.mxu0 0.0
    %487 = vmatpush1.xpose.msra.mxu0 0.0
    %488 = vmatprep.subr.mxu0 0.0
    %489 = vmatpush1.xpose.msra.mxu0 0.0
    %490 = vmatprep.mubr.f32.mxu0 0.0
    %491 = vmatmul.mubr.f32.gmra.mrb[0].mxu0 %v348
    %v492 = vpop.f32.mrb[0].mxu0
    %v493 = vadd.f32 0.0, %v492
    %v494 = vpop.f32.mrb[0].mxu0
    %495 = vdwg.mxu0
    %vm496 = vcmask 57344
    %v497 = vsel %vm496, %v420, -inf
    %498 = vmax.xlane.f32.xlu0 %v497
    %v499 = vpop.xlane.xlu0 %498
    %v500 = vsel %vm496, %v493, -inf
    %501 = vmax.xlane.f32.xlu0 %v500
    %v502 = vpop.xlane.xlu0 %501
    %v503 = vsub.f32 %v420, %v499
    %v504 = vsub.f32 %v493, %v502
    %v505 = vmul.f32 %v503, 1.442695
    %v506 = vpow.pop %v505
    %v507 = vmul.f32 %v504, 1.442695
    %v508 = vpow.pop %v507
    %v509 = vsel %vm496, %v506, 0.0
    %510 = vadd.xlane.f32.xlu0 %v509
    %v511 = vpop.xlane.xlu0 %510
    %v512 = vsel %vm496, %v508, 0.0
    %513 = vadd.xlane.f32.xlu0 %v512
    %v514 = vpop.xlane.xlu0 %513
    %v515 = vrcp.pop %v511
    %v516 = vmul.f32 %v506, %v515
    %v517 = vrcp.pop %v514
    %v518 = vmul.f32 %v508, %v517
    %519 = vst.msk [vmem:[#allocation11] sm:$0x1] %vm496, %v516
    %520 = vst.msk [vmem:[#allocation11 + $0x1] sm:$0x1] %vm496, %v518
    %vm521 = vcmask 64512
    %v523 = vsel %vm521, %v516, 0
    %525 = vmatprep.subr.mxu0 0.0
    %526 = vmatpush1.msra.mxu0 %v75
    %527 = vmatprep.subr.mxu0 0.0
    %528 = vmatpush1.msra.mxu0 0.0
    %529 = vmatprep.subr.mxu0 0.0
    %530 = vmatpush1.msra.mxu0 0.0
    %531 = vmatprep.subr.mxu0 0.0
    %532 = vmatpush1.msra.mxu0 0.0
    %533 = vmatprep.subr.mxu0 0.0
    %534 = vmatpush1.msra.mxu0 0.0
    %535 = vmatprep.subr.mxu0 0.0
    %536 = vmatpush1.msra.mxu0 0.0
    %537 = vmatprep.subr.mxu0 0.0
    %538 = vmatpush1.msra.mxu0 0.0
    %539 = vmatprep.subr.mxu0 0.0
    %540 = vmatpush1.msra.mxu0 0.0
    %541 = vmatprep.subr.mxu0 0.0
    %542 = vmatpush1.msra.mxu0 0.0
    %543 = vmatprep.subr.mxu0 0.0
    %544 = vmatpush1.msra.mxu0 0.0
    %545 = vmatprep.subr.mxu0 0.0
    %546 = vmatpush1.msra.mxu0 0.0
    %547 = vmatprep.subr.mxu0 0.0
    %548 = vmatpush1.msra.mxu0 0.0
    %549 = vmatprep.subr.mxu0 0.0
    %550 = vmatpush1.msra.mxu0 0.0
    %551 = vmatprep.subr.mxu0 0.0
    %552 = vmatpush1.msra.mxu0 0.0
    %553 = vmatprep.subr.mxu0 0.0
    %554 = vmatpush1.msra.mxu0 0.0
    %555 = vmatprep.subr.mxu0 0.0
    %556 = vmatpush1.msra.mxu0 0.0
    %557 = vmatprep.subr.mxu0 0.0
    %558 = vmatpush1.msra.mxu0 0.0
    %559 = vmatprep.subr.mxu0 0.0
    %560 = vmatpush1.msra.mxu0 0.0
    %561 = vmatprep.subr.mxu0 0.0
    %562 = vmatpush1.msra.mxu0 0.0
    %563 = vmatprep.subr.mxu0 0.0
    %564 = vmatpush1.msra.mxu0 0.0
    %565 = vmatprep.subr.mxu0 0.0
    %566 = vmatpush1.msra.mxu0 0.0
    %567 = vmatprep.subr.mxu0 0.0
    %568 = vmatpush1.msra.mxu0 0.0
    %569 = vmatprep.subr.mxu0 0.0
    %570 = vmatpush1.msra.mxu0 0.0
    %571 = vmatprep.subr.mxu0 0.0
    %572 = vmatpush1.msra.mxu0 0.0
    %573 = vmatprep.subr.mxu0 0.0
    %574 = vmatpush1.msra.mxu0 0.0
    %575 = vmatprep.subr.mxu0 0.0
    %576 = vmatpush1.msra.mxu0 0.0
    %577 = vmatprep.subr.mxu0 0.0
    %578 = vmatpush1.msra.mxu0 0.0
    %579 = vmatprep.subr.mxu0 0.0
    %580 = vmatpush1.msra.mxu0 0.0
    %581 = vmatprep.subr.mxu0 0.0
    %582 = vmatpush1.msra.mxu0 0.0
    %583 = vmatprep.subr.mxu0 0.0
    %584 = vmatpush1.msra.mxu0 0.0
    %585 = vmatprep.subr.mxu0 0.0
    %586 = vmatpush1.msra.mxu0 0.0
    %587 = vmatprep.subr.mxu0 0.0
    %588 = vmatpush1.msra.mxu0 0.0
    %589 = vmatprep.mubr.f32.mxu0 0.0
    %590 = vmatmul.mubr.f32.gmra.mrb[0].mxu0 %v523
    %v591 = vpop.f32.mrb[0].mxu0
    %v592 = vadd.f32 0.0, %v591
    %v593 = vpop.f32.mrb[0].mxu0
    %594 = vdwg.mxu0
    %v596 = vsel %vm521, %v518, 0
    %598 = vmatprep.subr.mxu0 0.0
    %599 = vmatpush1.msra.mxu0 %v76
    %600 = vmatprep.subr.mxu0 0.0
    %601 = vmatpush1.msra.mxu0 0.0
    %602 = vmatprep.subr.mxu0 0.0
    %603 = vmatpush1.msra.mxu0 0.0
    %604 = vmatprep.subr.mxu0 0.0
    %605 = vmatpush1.msra.mxu0 0.0
    %606 = vmatprep.subr.mxu0 0.0
    %607 = vmatpush1.msra.mxu0 0.0
    %608 = vmatprep.subr.mxu0 0.0
    %609 = vmatpush1.msra.mxu0 0.0
    %610 = vmatprep.subr.mxu0 0.0
    %611 = vmatpush1.msra.mxu0 0.0
    %612 = vmatprep.subr.mxu0 0.0
    %613 = vmatpush1.msra.mxu0 0.0
    %614 = vmatprep.subr.mxu0 0.0
    %615 = vmatpush1.msra.mxu0 0.0
    %616 = vmatprep.subr.mxu0 0.0
    %617 = vmatpush1.msra.mxu0 0.0
    %618 = vmatprep.subr.mxu0 0.0
    %619 = vmatpush1.msra.mxu0 0.0
    %620 = vmatprep.subr.mxu0 0.0
    %621 = vmatpush1.msra.mxu0 0.0
    %622 = vmatprep.subr.mxu0 0.0
    %623 = vmatpush1.msra.mxu0 0.0
    %624 = vmatprep.subr.mxu0 0.0
    %625 = vmatpush1.msra.mxu0 0.0
    %626 = vmatprep.subr.mxu0 0.0
    %627 = vmatpush1.msra.mxu0 0.0
    %628 = vmatprep.subr.mxu0 0.0
    %629 = vmatpush1.msra.mxu0 0.0
    %630 = vmatprep.subr.mxu0 0.0
    %631 = vmatpush1.msra.mxu0 0.0
    %632 = vmatprep.subr.mxu0 0.0
    %633 = vmatpush1.msra.mxu0 0.0
    %634 = vmatprep.subr.mxu0 0.0
    %635 = vmatpush1.msra.mxu0 0.0
    %636 = vmatprep.subr.mxu0 0.0
    %637 = vmatpush1.msra.mxu0 0.0
    %638 = vmatprep.subr.mxu0 0.0
    %639 = vmatpush1.msra.mxu0 0.0
    %640 = vmatprep.subr.mxu0 0.0
    %641 = vmatpush1.msra.mxu0 0.0
    %642 = vmatprep.subr.mxu0 0.0
    %643 = vmatpush1.msra.mxu0 0.0
    %644 = vmatprep.subr.mxu0 0.0
    %645 = vmatpush1.msra.mxu0 0.0
    %646 = vmatprep.subr.mxu0 0.0
    %647 = vmatpush1.msra.mxu0 0.0
    %648 = vmatprep.subr.mxu0 0.0
    %649 = vmatpush1.msra.mxu0 0.0
    %650 = vmatprep.subr.mxu0 0.0
    %651 = vmatpush1.msra.mxu0 0.0
    %652 = vmatprep.subr.mxu0 0.0
    %653 = vmatpush1.msra.mxu0 0.0
    %654 = vmatprep.subr.mxu0 0.0
    %655 = vmatpush1.msra.mxu0 0.0
    %656 = vmatprep.subr.mxu0 0.0
    %657 = vmatpush1.msra.mxu0 0.0
    %658 = vmatprep.subr.mxu0 0.0
    %659 = vmatpush1.msra.mxu0 0.0
    %660 = vmatprep.subr.mxu0 0.0
    %661 = vmatpush1.msra.mxu0 0.0
    %662 = vmatprep.mubr.f32.mxu0 0.0
    %663 = vmatmul.mubr.f32.gmra.mrb[0].mxu0 %v596
    %v664 = vpop.f32.mrb[0].mxu0
    %v665 = vadd.f32 0.0, %v664
    %v666 = vpop.f32.mrb[0].mxu0
    %667 = vdwg.mxu0
    %v669 = vrot.slane %v665, 7
    %vm671 = vcmask 1040384
    %v672 = vsel %vm671, %v592, %v669
    %v673 = vld [vmem:[%s0] sm:$0x3]
    %675 = vrot.lane.b32.xlu0 %v672, 16
    %v676 = vpop.permute.xlu0 %675
    %678 = vrot.lane.b32.xlu0 %v73, 48
    %v679 = vpop.permute.xlu0 %678
    %vm681 = vcmask 130048
    %v682 = vsel %vm681, %v673, %v676
    %vm683 = vcmask 392192
    %v684 = vsel %vm683, %v682, %v679
    %v685 = vld [vmem:[%s7] sm:$0xff]
    %v686 = vld [vmem:[%s7 + $0x8] sm:$0xff]
    %v687 = vld [vmem:[%s7 + $0x10] sm:$0xff]
    %v688 = vld [vmem:[%s7 + $0x18] sm:$0xff]
    %v689 = vld [vmem:[%s7 + $0x20] sm:$0xff]
    %v690 = vld [vmem:[%s7 + $0x28] sm:$0xff]
    %v691 = vld [vmem:[%s7 + $0x30] sm:$0xff]
    %v692 = vld [vmem:[%s7 + $0x38] sm:$0xff]
    %v693 = vld [vmem:[%s7 + $0x40] sm:$0xff]
    %v694 = vld [vmem:[%s7 + $0x48] sm:$0xff]
    %v695 = vld [vmem:[%s8] sm:$0x1]
    %v697 = vlaneseq
    %v698 = vshrl.u32 %v697, 7
    %v699 = vsub.s32 0, %v698
    %v700 = vrot.slane %v695, %v699
    %vm702 = vcmask 654336
    %v704 = vsel %vm702, %v684, 0
    %706 = vmatprep.subr.mxu0 0.0
    %707 = vmatpush1.msra.mxu0 %v685
    %708 = vmatprep.subr.mxu0 0.0
    %709 = vmatpush1.msra.mxu0 %v686
    %710 = vmatprep.subr.mxu0 0.0
    %711 = vmatpush1.msra.mxu0 %v687
    %712 = vmatprep.subr.mxu0 0.0
    %713 = vmatpush1.msra.mxu0 %v688
    %714 = vmatprep.subr.mxu0 0.0
    %715 = vmatpush1.msra.mxu0 %v689
    %716 = vmatprep.subr.mxu0 0.0
    %717 = vmatpush1.msra.mxu0 %v690
    %718 = vmatprep.subr.mxu0 0.0
    %719 = vmatpush1.msra.mxu0 %v691
    %720 = vmatprep.subr.mxu0 0.0
    %721 = vmatpush1.msra.mxu0 %v692
    %722 = vmatprep.subr.mxu0 0.0
    %723 = vmatpush1.msra.mxu0 %v693
    %724 = vmatprep.subr.mxu0 0.0
    %725 = vmatpush1.msra.mxu0 %v694
    %726 = vmatprep.subr.mxu0 0.0
    %727 = vmatpush1.msra.mxu0 0.0
    %728 = vmatprep.subr.mxu0 0.0
    %729 = vmatpush1.msra.mxu0 0.0
    %730 = vmatprep.subr.mxu0 0.0
    %731 = vmatpush1.msra.mxu0 0.0
    %732 = vmatprep.subr.mxu0 0.0
    %733 = vmatpush1.msra.mxu0 0.0
    %734 = vmatprep.subr.mxu0 0.0
    %735 = vmatpush1.msra.mxu0 0.0
    %736 = vmatprep.subr.mxu0 0.0
    %737 = vmatpush1.msra.mxu0 0.0
    %738 = vmatprep.subr.mxu0 0.0
    %739 = vmatpush1.msra.mxu0 0.0
    %740 = vmatprep.subr.mxu0 0.0
    %741 = vmatpush1.msra.mxu0 0.0
    %742 = vmatprep.subr.mxu0 0.0
    %743 = vmatpush1.msra.mxu0 0.0
    %744 = vmatprep.subr.mxu0 0.0
    %745 = vmatpush1.msra.mxu0 0.0
    %746 = vmatprep.subr.mxu0 0.0
    %747 = vmatpush1.msra.mxu0 0.0
    %748 = vmatprep.subr.mxu0 0.0
    %749 = vmatpush1.msra.mxu0 0.0
    %750 = vmatprep.subr.mxu0 0.0
    %751 = vmatpush1.msra.mxu0 0.0
    %752 = vmatprep.subr.mxu0 0.0
    %753 = vmatpush1.msra.mxu0 0.0
    %754 = vmatprep.subr.mxu0 0.0
    %755 = vmatpush1.msra.mxu0 0.0
    %756 = vmatprep.subr.mxu0 0.0
    %757 = vmatpush1.msra.mxu0 0.0
    %758 = vmatprep.subr.mxu0 0.0
    %759 = vmatpush1.msra.mxu0 0.0
    %760 = vmatprep.subr.mxu0 0.0
    %761 = vmatpush1.msra.mxu0 0.0
    %762 = vmatprep.subr.mxu0 0.0
    %763 = vmatpush1.msra.mxu0 0.0
    %764 = vmatprep.subr.mxu0 0.0
    %765 = vmatpush1.msra.mxu0 0.0
    %766 = vmatprep.subr.mxu0 0.0
    %767 = vmatpush1.msra.mxu0 0.0
    %768 = vmatprep.subr.mxu0 0.0
    %769 = vmatpush1.msra.mxu0 0.0
    %770 = vmatprep.mubr.f32.mxu0 0.0
    %771 = vmatmul.mubr.f32.gmra.mrb[0].mxu0 %v704
    %v772 = vpop.f32.mrb[0].mxu0
    %v773 = vadd.f32 %v700, %v772
    %v774 = vpop.f32.mrb[0].mxu0
    %775 = vdwg.mxu0
    %v776 = vxor.u32 %v773, 2147483648
    %v777 = vmul.f32 %v776, 1.442695
    %v778 = vpow.pop %v777
    %v779 = vadd.f32 %v778, 1.0
    %v780 = vrcp.pop %v779
    %v781 = vmul.f32 1.0, %v780
    %v782 = vtanh.pop %v773
    %784 = vrot.lane.b32.xlu0 %v74, 32
    %v785 = vpop.permute.xlu0 %784
    %v787 = vmul.f32 %v781, %v785
    %789 = vrot.lane.b32.xlu0 %v782, 64
    %v790 = vpop.permute.xlu0 %789
    %v792 = vmul.f32 %v781, %v790
    %794 = vrot.lane.b32.xlu0 %v792, 32
    %v795 = vpop.permute.xlu0 %794
    %v797 = vadd.f32 %v787, %v795
    %v798 = vtanh.pop %v797
    %800 = vrot.lane.b32.xlu0 %v798, 64
    %v801 = vpop.permute.xlu0 %800
    %v803 = vmul.f32 %v781, %v801
    %805 = vrot.lane.b32.xlu0 %v797, 96
    %v806 = vpop.permute.xlu0 %805
    %vm808 = vcmask 254976
    %809 = vst.msk [vmem:[#allocation10] sm:$0x3] %vm808, %v806
    %811 = vrot.lane.b32.xlu0 %v803, 32
    %v812 = vpop.permute.xlu0 %811
    %814 = vst.msk [vmem:[#allocation8] sm:$0x3] %vm808, %v812
    %v815 = vld [vmem:[#allocation5] sm:$0xff]
    %v816 = vld [vmem:[#allocation5 + $0x8] sm:$0xff]
    %v817 = vld [vmem:[#allocation5 + $0x10] sm:$0xff]
    %v818 = vld [vmem:[#allocation5 + $0x18] sm:$0xff]
    %v819 = vld [vmem:[%s10] sm:$0x1]
    %v821 = vlaneseq
    %v822 = vshrl.u32 %v821, 7
    %v823 = vsub.s32 0, %v822
    %v824 = vrot.slane %v819, %v823
    %v826 = vsel %vm81, %v812, 0
    %828 = vmatprep.subr.mxu0 0.0
    %829 = vmatpush1.msra.mxu0 %v815
    %830 = vmatprep.subr.mxu0 0.0
    %831 = vmatpush1.msra.mxu0 %v816
    %832 = vmatprep.subr.mxu0 0.0
    %833 = vmatpush1.msra.mxu0 %v817
    %834 = vmatprep.subr.mxu0 0.0
    %835 = vmatpush1.msra.mxu0 %v818
    %836 = vmatprep.subr.mxu0 0.0
    %837 = vmatpush1.msra.mxu0 0.0
    %838 = vmatprep.subr.mxu0 0.0
    %839 = vmatpush1.msra.mxu0 0.0
    %840 = vmatprep.subr.mxu0 0.0
    %841 = vmatpush1.msra.mxu0 0.0
    %842 = vmatprep.subr.mxu0 0.0
    %843 = vmatpush1.msra.mxu0 0.0
    %844 = vmatprep.subr.mxu0 0.0
    %845 = vmatpush1.msra.mxu0 0.0
    %846 = vmatprep.subr.mxu0 0.0
    %847 = vmatpush1.msra.mxu0 0.0
    %848 = vmatprep.subr.mxu0 0.0
    %849 = vmatpush1.msra.mxu0 0.0
    %850 = vmatprep.subr.mxu0 0.0
    %851 = vmatpush1.msra.mxu0 0.0
    %852 = vmatprep.subr.mxu0 0.0
    %853 = vmatpush1.msra.mxu0 0.0
    %854 = vmatprep.subr.mxu0 0.0
    %855 = vmatpush1.msra.mxu0 0.0
    %856 = vmatprep.subr.mxu0 0.0
    %857 = vmatpush1.msra.mxu0 0.0
    %858 = vmatprep.subr.mxu0 0.0
    %859 = vmatpush1.msra.mxu0 0.0
    %860 = vmatprep.subr.mxu0 0.0
    %861 = vmatpush1.msra.mxu0 0.0
    %862 = vmatprep.subr.mxu0 0.0
    %863 = vmatpush1.msra.mxu0 0.0
    %864 = vmatprep.subr.mxu0 0.0
    %865 = vmatpush1.msra.mxu0 0.0
    %866 = vmatprep.subr.mxu0 0.0
    %867 = vmatpush1.msra.mxu0 0.0
    %868 = vmatprep.subr.mxu0 0.0
    %869 = vmatpush1.msra.mxu0 0.0
    %870 = vmatprep.subr.mxu0 0.0
    %871 = vmatpush1.msra.mxu0 0.0
    %872 = vmatprep.subr.mxu0 0.0
    %873 = vmatpush1.msra.mxu0 0.0
    %874 = vmatprep.subr.mxu0 0.0
    %875 = vmatpush1.msra.mxu0 0.0
    %876 = vmatprep.subr.mxu0 0.0
    %877 = vmatpush1.msra.mxu0 0.0
    %878 = vmatprep.subr.mxu0 0.0
    %879 = vmatpush1.msra.mxu0 0.0
    %880 = vmatprep.subr.mxu0 0.0
    %881 = vmatpush1.msra.mxu0 0.0
    %882 = vmatprep.subr.mxu0 0.0
    %883 = vmatpush1.msra.mxu0 0.0
    %884 = vmatprep.subr.mxu0 0.0
    %885 = vmatpush1.msra.mxu0 0.0
    %886 = vmatprep.subr.mxu0 0.0
    %887 = vmatpush1.msra.mxu0 0.0
    %888 = vmatprep.subr.mxu0 0.0
    %889 = vmatpush1.msra.mxu0 0.0
    %890 = vmatprep.subr.mxu0 0.0
    %891 = vmatpush1.msra.mxu0 0.0
    %892 = vmatprep.mubr.f32.mxu0 0.0
    %893 = vmatmul.mubr.f32.gmra.mrb[0].mxu0 %v826
    %v894 = vpop.f32.mrb[0].mxu0
    %v895 = vadd.f32 %v824, %v894
    %v896 = vpop.f32.mrb[0].mxu0
    %897 = vdwg.mxu0
    %898 = vst [vmem:[#allocation7] sm:$0x3] %v895
    // Predicated region
    $region54: #{decoder_rnn_forward.1} parent=1 // pred_check
      _
    $region55: #{decoder_rnn_forward.1} parent=1 // pred_check_branch
      %900 = sbr.rel (0) target = $region57
    $region56: #{decoder_rnn_forward.1} parent=1 // pred_region
      %s902 = ssub.s32 32, 32
      %903 = vsyncadd [#allocation4], %s902
      %s905 = sshll.u32 [#allocation7], 4
      %s906 = int_to_ptr.vmem [resolvable:$true] %s905
      %908 = dma.vmem_to_hbm [thread:$0]  %s906, 32, %s11, [#allocation4]
    $region57: #{decoder_rnn_forward.1} parent=1 // pred_fallthru
      _
    // Predicated region
    $region58: #{decoder_rnn_forward.1} parent=1 // pred_check
      _
    $region59: #{decoder_rnn_forward.1} parent=1 // pred_check_branch
      %910 = sbr.rel (0) target = $region61
    $region60: #{decoder_rnn_forward.1} parent=1 // pred_region
      %s912 = ssub.s32 32, 32
      %913 = vsyncadd [#allocation9], %s912
      %s915 = sshll.u32 [#allocation8], 4
      %s916 = int_to_ptr.vmem [resolvable:$true] %s915
      %918 = dma.vmem_to_hbm [thread:$0]  %s916, 32, %s12, [#allocation9]
    $region61: #{decoder_rnn_forward.1} parent=1 // pred_fallthru
      _
    // Predicated region
    $region62: #{decoder_rnn_forward.1} parent=1 // pred_check
      _
    $region63: #{decoder_rnn_forward.1} parent=1 // pred_check_branch
      %920 = sbr.rel (0) target = $region65
    $region64: #{decoder_rnn_forward.1} parent=1 // pred_region
      %s922 = ssub.s32 32, 32
      %923 = vsyncadd [#allocation9], %s922
      %s925 = sshll.u32 [#allocation10], 4
      %s926 = int_to_ptr.vmem [resolvable:$true] %s925
      %928 = dma.vmem_to_hbm [thread:$0]  %s926, 32, %s13, [#allocation9]
    $region65: #{decoder_rnn_forward.1} parent=1 // pred_fallthru
      _
    // Predicated region
    $region66: #{decoder_rnn_forward.1} parent=1 // pred_check
      _
    $region67: #{decoder_rnn_forward.1} parent=1 // pred_check_branch
      %930 = sbr.rel (0) target = $region69
    $region68: #{decoder_rnn_forward.1} parent=1 // pred_region
      %s932 = ssub.s32 32, 32
      %933 = vsyncadd [#allocation12], %s932
      %s934 = sshll.u32 [#allocation11], 4
      %s935 = int_to_ptr.vmem [resolvable:$true] %s934
      %940 = dma.vmem_to_hbm [thread:$0]  %s935, 32, %s14, [#allocation12], 16, 16, 1
    $region69: #{decoder_rnn_forward.1} parent=1 // pred_fallthru
      _
    // Predicated region
    $region70: #{decoder_rnn_forward.1} parent=1 // pred_check
      _
    $region71: #{decoder_rnn_forward.1} parent=1 // pred_check_branch
      %942 = sbr.rel (0) target = $region73
    $region72: #{decoder_rnn_forward.1} parent=1 // pred_region
      %943 = dma.done [#allocation4], 32
    $region73: #{decoder_rnn_forward.1} parent=1 // pred_fallthru
      _
    // Predicated region
    $region74: #{decoder_rnn_forward.1} parent=1 // pred_check
      _
    $region75: #{decoder_rnn_forward.1} parent=1 // pred_check_branch
      %945 = sbr.rel (0) target = $region77
    $region76: #{decoder_rnn_forward.1} parent=1 // pred_region
      %946 = dma.done [#allocation9], 32
    $region77: #{decoder_rnn_forward.1} parent=1 // pred_fallthru
      _
    // Predicated region
    $region78: #{decoder_rnn_forward.1} parent=1 // pred_check
      _
    $region79: #{decoder_rnn_forward.1} parent=1 // pred_check_branch
      %948 = sbr.rel (0) target = $region81
    $region80: #{decoder_rnn_forward.1} parent=1 // pred_region
      %949 = dma.done [#allocation9], 32
    $region81: #{decoder_rnn_forward.1} parent=1 // pred_fallthru
      _
    // Predicated region
    $region82: #{decoder_rnn_forward.1} parent=1 // pred_check
      _
    $region83: #{decoder_rnn_forward.1} parent=1 // pred_check_branch
      %951 = sbr.rel (0) target = $region85
    $region84: #{decoder_rnn_forward.1} parent=1 // pred_region
      %952 = dma.done [#allocation12], 32
    $region85: #{decoder_rnn_forward.1} parent=1 // pred_fallthru
      _
    %953 = vsyncpa [#allocation3], 1
    %954 = vsyncpa [#allocation6], 1
    %955 = vsyncpa [#allocation4], 1
    %956 = vsyncpa [#allocation9], 1
    %957 = vsyncpa [#allocation12], 1

</llo_original>
